<compile_context>
chip_gen: v7x
topology: tpu7x:2x2x1
jax: 0.10.0
libtpu: 0.0.40
codegen_flags: <defaults>
</compile_context>

<pallas_src>
import jax
import jax.numpy as jnp
from jax.experimental import pallas as pl

# ---- problem sizes ----------------------------------------------------------
B = 256                      # noise samples per call (single full-batch step)
Z = 32                       # latent dim (block == full last dim -> legal)
H = 128                      # generator hidden dim
OUT_C, OUT_H, OUT_W = 1, 16, 16
OUT = OUT_C * OUT_H * OUT_W  # 256, lane-dense multiple of 128


def generator_kernel(x_ref, w1_ref, b1_ref, w2_ref, b2_ref, o_ref):
    # x:  [B, Z]  f32      w1: [Z, H]    bf16    b1: [1, H]   f32
    # w2: [H, OUT] bf16    b2: [1, OUT]  f32     o:  [B, OUT] f32
    x = x_ref[...].astype(jnp.bfloat16)
    h = jnp.dot(x, w1_ref[...], preferred_element_type=jnp.float32)
    h = jnp.maximum(h + b1_ref[...], 0.0)                    # bias + ReLU (VPU, f32)
    y = jnp.dot(h.astype(jnp.bfloat16), w2_ref[...],
                preferred_element_type=jnp.float32)
    o_ref[...] = jnp.tanh(y + b2_ref[...])                   # bias (VPU) + tanh (EUP)


def generator_forward(x, w1, b1, w2, b2):
    """Fused generator MLP; single grid step, whole batch resident in VMEM."""
    return pl.pallas_call(
        generator_kernel,
        out_shape=jax.ShapeDtypeStruct((B, OUT), jnp.float32),
        grid=(1,),
        in_specs=[
            pl.BlockSpec((B, Z),    lambda i: (0, 0)),   # full batch, one DMA
            pl.BlockSpec((Z, H),    lambda i: (0, 0)),   # weights resident
            pl.BlockSpec((1, H),    lambda i: (0, 0)),
            pl.BlockSpec((H, OUT),  lambda i: (0, 0)),
            pl.BlockSpec((1, OUT),  lambda i: (0, 0)),
        ],
        out_specs=pl.BlockSpec((B, OUT), lambda i: (0, 0)),
    )(x, w1, b1, w2, b2)


def base_model_forward(x, params):
    """BaseModel.forward: noise = self.generator(input); return noise."""
    w1, b1, w2, b2 = params
    flat = generator_forward(x, w1, b1, w2, b2)
    # glue reshape to NCHW image-like noise output (free XLA metadata op;
    # keeping it out of the kernel avoids a 16-wide masked-store path)
    return flat.reshape(B, OUT_C, OUT_H, OUT_W)


def init_params(key):
    k1, k2, k3, k4 = jax.random.split(key, 4)
    # Weights stored bf16 (halves weight DMA bytes, 2x MXU throughput on
    # v6e/v7x); biases kept f32 for the f32 elementwise path.
    w1 = (jax.random.normal(k1, (Z, H), jnp.float32) * 0.05).astype(jnp.bfloat16)
    b1 = jax.random.normal(k2, (1, H), jnp.float32) * 0.01
    w2 = (jax.random.normal(k3, (H, OUT), jnp.float32) * 0.05).astype(jnp.bfloat16)
    b2 = jax.random.normal(k4, (1, OUT), jnp.float32) * 0.01
    return w1, b1, w2, b2


if __name__ == "__main__":
    key = jax.random.PRNGKey(0)
    k_in, k_params = jax.random.split(key)
    x = jax.random.normal(k_in, (B, Z), jnp.float32)
    params = init_params(k_params)

    noise = base_model_forward(x, params)
    jax.block_until_ready(noise)

    # reference in plain JAX with the same cast sequence (bf16 matmuls, f32 acc)
    w1, b1, w2, b2 = params
    h_ref = jnp.dot(x.astype(jnp.bfloat16), w1,
                    preferred_element_type=jnp.float32)
    h_ref = jnp.maximum(h_ref + b1, 0.0)
    y_ref = jnp.dot(h_ref.astype(jnp.bfloat16), w2,
                    preferred_element_type=jnp.float32)
    ref = jnp.tanh(y_ref + b2).reshape(B, OUT_C, OUT_H, OUT_W)

    assert noise.shape == (B, OUT_C, OUT_H, OUT_W)
    assert jnp.allclose(noise, ref, atol=2e-2, rtol=2e-2), "mismatch vs reference"

    print("KERNEL_OK")
</pallas_src>

<mosaic_0001>
module attributes {stable_mosaic.version = 11 : i64} {
  func.func @generator_kernel(%arg0: i32, %arg1: memref<256x32xf32, #tpu.memory_space<vmem>>, %arg2: memref<32x128xbf16, #tpu.memory_space<vmem>>, %arg3: memref<1x128xf32, #tpu.memory_space<vmem>>, %arg4: memref<128x256xbf16, #tpu.memory_space<vmem>>, %arg5: memref<1x256xf32, #tpu.memory_space<vmem>>, %arg6: memref<256x256xf32, #tpu.memory_space<vmem>>) attributes {dimension_semantics = [#tpu.dimension_semantics<arbitrary>], iteration_bounds = array<i64: 1>, scalar_prefetch = 0 : i64, scratch_operands = 0 : i64, tpu.core_type = #tpu.core_type<tc>, window_params = [{pipeline_mode = #tpu.pipeline_mode<synchronous>, transform_indices = @transform_0, window_bounds = array<i64: 256, 32>}, {pipeline_mode = #tpu.pipeline_mode<synchronous>, transform_indices = @transform_1, window_bounds = array<i64: 32, 128>}, {pipeline_mode = #tpu.pipeline_mode<synchronous>, transform_indices = @transform_2, window_bounds = array<i64: 1, 128>}, {pipeline_mode = #tpu.pipeline_mode<synchronous>, transform_indices = @transform_3, window_bounds = array<i64: 128, 256>}, {pipeline_mode = #tpu.pipeline_mode<synchronous>, transform_indices = @transform_4, window_bounds = array<i64: 1, 256>}, {pipeline_mode = #tpu.pipeline_mode<synchronous>, transform_indices = @transform_5, window_bounds = array<i64: 256, 256>}]} {
    %c0 = arith.constant 0 : index
    %c0_0 = arith.constant 0 : index
    %0 = vector.load %arg1[%c0, %c0_0] : memref<256x32xf32, #tpu.memory_space<vmem>>, vector<256x32xf32>
    %1 = arith.truncf %0 : vector<256x32xf32> to vector<256x32xbf16>
    %c0_1 = arith.constant 0 : index
    %c0_2 = arith.constant 0 : index
    %2 = vector.load %arg2[%c0_1, %c0_2] : memref<32x128xbf16, #tpu.memory_space<vmem>>, vector<32x128xbf16>
    %cst = arith.constant dense<0.000000e+00> : vector<256x128xf32>
    %3 = tpu.matmul %1, %2, %cst {dimension_numbers = #tpu.dot_dimension_numbers<[1], [0], [0], [1], [0, 0, 1, 1], [], []>} : vector<256x32xbf16>, vector<32x128xbf16>, vector<256x128xf32> -> vector<256x128xf32>
    %c0_3 = arith.constant 0 : index
    %c0_4 = arith.constant 0 : index
    %4 = vector.load %arg3[%c0_3, %c0_4] : memref<1x128xf32, #tpu.memory_space<vmem>>, vector<1x128xf32>
    %5 = vector.broadcast %4 : vector<1x128xf32> to vector<256x128xf32>
    %6 = arith.addf %3, %5 : vector<256x128xf32>
    %cst_5 = arith.constant 0.000000e+00 : f32
    %7 = vector.broadcast %cst_5 : f32 to vector<256x128xf32>
    %8 = arith.maximumf %6, %7 : vector<256x128xf32>
    %9 = arith.truncf %8 : vector<256x128xf32> to vector<256x128xbf16>
    %c0_6 = arith.constant 0 : index
    %c0_7 = arith.constant 0 : index
    %10 = vector.load %arg4[%c0_6, %c0_7] : memref<128x256xbf16, #tpu.memory_space<vmem>>, vector<128x256xbf16>
    %cst_8 = arith.constant dense<0.000000e+00> : vector<256x256xf32>
    %11 = tpu.matmul %9, %10, %cst_8 {dimension_numbers = #tpu.dot_dimension_numbers<[1], [0], [0], [1], [0, 0, 1, 1], [], []>} : vector<256x128xbf16>, vector<128x256xbf16>, vector<256x256xf32> -> vector<256x256xf32>
    %c0_9 = arith.constant 0 : index
    %c0_10 = arith.constant 0 : index
    %12 = vector.load %arg5[%c0_9, %c0_10] : memref<1x256xf32, #tpu.memory_space<vmem>>, vector<1x256xf32>
    %13 = vector.broadcast %12 : vector<1x256xf32> to vector<256x256xf32>
    %14 = arith.addf %11, %13 : vector<256x256xf32>
    %15 = math.tanh %14 : vector<256x256xf32>
    %c0_11 = arith.constant 0 : index
    %c0_12 = arith.constant 0 : index
    %16 = vector.load %arg6[%c0_11, %c0_12] : memref<256x256xf32, #tpu.memory_space<vmem>>, vector<256x256xf32>
    tpu.vector_store %arg6[%c0_11, %c0_12], %15 {strides = array<i32>} : memref<256x256xf32, #tpu.memory_space<vmem>>, vector<256x256xf32>,
    return
  }
  func.func @transform_0(%arg0: i32) -> (i32, i32) {
    %c0_i32 = arith.constant 0 : i32
    %c0_i32_0 = arith.constant 0 : i32
    %c0_i32_1 = arith.constant 0 : i32
    return %c0_i32, %c0_i32_0 : i32, i32
  }
  func.func @transform_1(%arg0: i32) -> (i32, i32) {
    %c0_i32 = arith.constant 0 : i32
    %c0_i32_0 = arith.constant 0 : i32
    %c0_i32_1 = arith.constant 0 : i32
    return %c0_i32, %c0_i32_0 : i32, i32
  }
  func.func @transform_2(%arg0: i32) -> (i32, i32) {
    %c0_i32 = arith.constant 0 : i32
    %c0_i32_0 = arith.constant 0 : i32
    %c0_i32_1 = arith.constant 0 : i32
    return %c0_i32, %c0_i32_0 : i32, i32
  }
  func.func @transform_3(%arg0: i32) -> (i32, i32) {
    %c0_i32 = arith.constant 0 : i32
    %c0_i32_0 = arith.constant 0 : i32
    %c0_i32_1 = arith.constant 0 : i32
    return %c0_i32, %c0_i32_0 : i32, i32
  }
  func.func @transform_4(%arg0: i32) -> (i32, i32) {
    %c0_i32 = arith.constant 0 : i32
    %c0_i32_0 = arith.constant 0 : i32
    %c0_i32_1 = arith.constant 0 : i32
    return %c0_i32, %c0_i32_0 : i32, i32
  }
  func.func @transform_5(%arg0: i32) -> (i32, i32) {
    %c0_i32 = arith.constant 0 : i32
    %c0_i32_0 = arith.constant 0 : i32
    %c0_i32_1 = arith.constant 0 : i32
    return %c0_i32, %c0_i32_0 : i32, i32
  }
}

</mosaic_0001>

<llo_original>
// kernel: tpu_custom_call.1
$region0: #{tpu_custom_call.1}
  #allocation0 [shape = 'u32[]', space=smem, size = 0x4, offset = 0x4, fixed_abs, tag = 'smem constant byte address 0x4 - core index']
  #allocation1 [shape = 'u32[144,128]{1,0:T(1,128)}', space=vmem, size = 0x12000, scoped, tag = 'internal scratch']
  %s0 = inlined_call_operand.vmem [shape: f32[256,32], index: 0, kind: input, shape index: {}]
  %s1 = inlined_call_operand.vmem [shape: bf16[32,128], index: 1, kind: input, shape index: {}]
  %s2 = inlined_call_operand.vmem [shape: f32[1,128], index: 2, kind: input, shape index: {}]
  %s3 = inlined_call_operand.vmem [shape: bf16[128,256], index: 3, kind: input, shape index: {}]
  %s4 = inlined_call_operand.vmem [shape: f32[1,256], index: 4, kind: input, shape index: {}]
  %s5 = inlined_call_operand.hbm [shape: f32[256,256], index: 5, kind: output, shape index: {}]
  %s6 = sld [smem:[#allocation0]]
  $region30: #{tpu_custom_call.1} parent=0
    _
  %s8 = ssub.s32 1, %s6
  %s9 = scalar_select 0, %s8, %s6
  $region1: #{tpu_custom_call.1} parent=0
    #allocation2 [shape = 'u8[262144]{0}', space=vmem, size = 0x40000, scoped, tag = 'output window, operand 0, single buffered']
    #allocation3 [shape = 's32[1]{0}', space=sflag, size = 0x4, scoped, tag = 'scoped memory for tpu_custom_call.1']
    %10 = vsyncpa [#allocation3], 0
    // Predicated region
    $region2: #{tpu_custom_call.1} parent=1 // pred_check
      _
    $region3: #{tpu_custom_call.1} parent=1 // pred_check_branch
      %12 = sbr.rel (0) target = $region5
    $region4: #{tpu_custom_call.1} parent=1 // pred_region
      _
    $region5: #{tpu_custom_call.1} parent=1 // pred_fallthru
      _
    // Predicated region
    $region6: #{tpu_custom_call.1} parent=1 // pred_check
      _
    $region7: #{tpu_custom_call.1} parent=1 // pred_check_branch
      %14 = sbr.rel (0) target = $region9
    $region8: #{tpu_custom_call.1} parent=1 // pred_region
      _
    $region9: #{tpu_custom_call.1} parent=1 // pred_fallthru
      _
    // Predicated region
    $region10: #{tpu_custom_call.1} parent=1 // pred_check
      _
    $region11: #{tpu_custom_call.1} parent=1 // pred_check_branch
      %16 = sbr.rel (0) target = $region13
    $region12: #{tpu_custom_call.1} parent=1 // pred_region
      _
    $region13: #{tpu_custom_call.1} parent=1 // pred_fallthru
      _
    // Predicated region
    $region14: #{tpu_custom_call.1} parent=1 // pred_check
      _
    $region15: #{tpu_custom_call.1} parent=1 // pred_check_branch
      %18 = sbr.rel (0) target = $region17
    $region16: #{tpu_custom_call.1} parent=1 // pred_region
      _
    $region17: #{tpu_custom_call.1} parent=1 // pred_fallthru
      _
    // Predicated region
    $region18: #{tpu_custom_call.1} parent=1 // pred_check
      _
    $region19: #{tpu_custom_call.1} parent=1 // pred_check_branch
      %20 = sbr.rel (0) target = $region21
    $region20: #{tpu_custom_call.1} parent=1 // pred_region
      _
    $region21: #{tpu_custom_call.1} parent=1 // pred_fallthru
      _
    %v22 = vld [vmem:[%s0] sm:$0xff]
    %v23 = vld [vmem:[%s0 + $0x8] sm:$0xff]
    %v24 = vld [vmem:[%s0 + $0x10] sm:$0xff]
    %v25 = vld [vmem:[%s0 + $0x18] sm:$0xff]
    %v26 = vld [vmem:[%s0 + $0x20] sm:$0xff]
    %v27 = vld [vmem:[%s0 + $0x28] sm:$0xff]
    %v28 = vld [vmem:[%s0 + $0x30] sm:$0xff]
    %v29 = vld [vmem:[%s0 + $0x38] sm:$0xff]
    %v30 = vld [vmem:[%s0 + $0x40] sm:$0xff]
    %v31 = vld [vmem:[%s0 + $0x48] sm:$0xff]
    %v32 = vld [vmem:[%s0 + $0x50] sm:$0xff]
    %v33 = vld [vmem:[%s0 + $0x58] sm:$0xff]
    %v34 = vld [vmem:[%s0 + $0x60] sm:$0xff]
    %v35 = vld [vmem:[%s0 + $0x68] sm:$0xff]
    %v36 = vld [vmem:[%s0 + $0x70] sm:$0xff]
    %v37 = vld [vmem:[%s0 + $0x78] sm:$0xff]
    %v38 = vld [vmem:[%s0 + $0x80] sm:$0xff]
    %v39 = vld [vmem:[%s0 + $0x88] sm:$0xff]
    %v40 = vld [vmem:[%s0 + $0x90] sm:$0xff]
    %v41 = vld [vmem:[%s0 + $0x98] sm:$0xff]
    %v42 = vld [vmem:[%s0 + $0xa0] sm:$0xff]
    %v43 = vld [vmem:[%s0 + $0xa8] sm:$0xff]
    %v44 = vld [vmem:[%s0 + $0xb0] sm:$0xff]
    %v45 = vld [vmem:[%s0 + $0xb8] sm:$0xff]
    %v46 = vld [vmem:[%s0 + $0xc0] sm:$0xff]
    %v47 = vld [vmem:[%s0 + $0xc8] sm:$0xff]
    %v48 = vld [vmem:[%s0 + $0xd0] sm:$0xff]
    %v49 = vld [vmem:[%s0 + $0xd8] sm:$0xff]
    %v50 = vld [vmem:[%s0 + $0xe0] sm:$0xff]
    %v51 = vld [vmem:[%s0 + $0xe8] sm:$0xff]
    %v52 = vld [vmem:[%s0 + $0xf0] sm:$0xff]
    %v53 = vld [vmem:[%s0 + $0xf8] sm:$0xff]
    %v54 = vpack.c.bf16 %v23, %v22
    %v55 = vpack.c.bf16 %v25, %v24
    %v56 = vpack.c.bf16 %v27, %v26
    %v57 = vpack.c.bf16 %v29, %v28
    %v58 = vpack.c.bf16 %v31, %v30
    %v59 = vpack.c.bf16 %v33, %v32
    %v60 = vpack.c.bf16 %v35, %v34
    %v61 = vpack.c.bf16 %v37, %v36
    %v62 = vpack.c.bf16 %v39, %v38
    %v63 = vpack.c.bf16 %v41, %v40
    %v64 = vpack.c.bf16 %v43, %v42
    %v65 = vpack.c.bf16 %v45, %v44
    %v66 = vpack.c.bf16 %v47, %v46
    %v67 = vpack.c.bf16 %v49, %v48
    %v68 = vpack.c.bf16 %v51, %v50
    %v69 = vpack.c.bf16 %v53, %v52
    %v70 = vld [vmem:[%s1] sm:$0xf]
    %v71 = vld [vmem:[%s1 + $0x4] sm:$0xf]
    %v72 = vld [vmem:[%s1 + $0x8] sm:$0xf]
    %v73 = vld [vmem:[%s1 + $0xc] sm:$0xf]
    %v74 = vld [vmem:[%s2] sm:$0x1]
    %v76 = vlaneseq
    %v77 = vshrl.u32 %v76, 7
    %v78 = vsub.s32 0, %v77
    %v79 = vrot.slane %v74, %v78
    %v85 = vunpack.c.l.b16 %v70
    %v86 = vunpack.c.l.b16 %v71
    %v87 = vunpack.c.l.b16 %v72
    %v88 = vunpack.c.l.b16 %v73
    %v89 = vpack.c.b16 %v86, %v85
    %v90 = vpack.c.b16 %v88, %v87
    %vm93 = vcmask 261120
    %v95 = vsel %vm93, %v54, 0
    %v98 = vsel %vm93, %v55, 0
    %v101 = vsel %vm93, %v56, 0
    %v104 = vsel %vm93, %v57, 0
    %v107 = vsel %vm93, %v58, 0
    %v110 = vsel %vm93, %v59, 0
    %v113 = vsel %vm93, %v60, 0
    %v116 = vsel %vm93, %v61, 0
    %v119 = vsel %vm93, %v62, 0
    %v122 = vsel %vm93, %v63, 0
    %v125 = vsel %vm93, %v64, 0
    %v128 = vsel %vm93, %v65, 0
    %v131 = vsel %vm93, %v66, 0
    %v134 = vsel %vm93, %v67, 0
    %v137 = vsel %vm93, %v68, 0
    %v140 = vsel %vm93, %v69, 0
    %142 = vmatprep.subr.bf16.mxu0 0
    %143 = vmatpush1.bf16.msra.mxu0 %v89
    %144 = vmatprep.subr.bf16.mxu0 0
    %145 = vmatpush1.bf16.msra.mxu0 %v90
    %146 = vmatprep.subr.bf16.mxu0 0
    %147 = vmatpush1.bf16.msra.mxu0 0
    %148 = vmatprep.subr.bf16.mxu0 0
    %149 = vmatpush1.bf16.msra.mxu0 0
    %150 = vmatprep.subr.bf16.mxu0 0
    %151 = vmatpush1.bf16.msra.mxu0 0
    %152 = vmatprep.subr.bf16.mxu0 0
    %153 = vmatpush1.bf16.msra.mxu0 0
    %154 = vmatprep.subr.bf16.mxu0 0
    %155 = vmatpush1.bf16.msra.mxu0 0
    %156 = vmatprep.subr.bf16.mxu0 0
    %157 = vmatpush1.bf16.msra.mxu0 0
    %158 = vmatprep.subr.bf16.mxu0 0
    %159 = vmatpush1.bf16.msra.mxu0 0
    %160 = vmatprep.subr.bf16.mxu0 0
    %161 = vmatpush1.bf16.msra.mxu0 0
    %162 = vmatprep.subr.bf16.mxu0 0
    %163 = vmatpush1.bf16.msra.mxu0 0
    %164 = vmatprep.subr.bf16.mxu0 0
    %165 = vmatpush1.bf16.msra.mxu0 0
    %166 = vmatprep.subr.bf16.mxu0 0
    %167 = vmatpush1.bf16.msra.mxu0 0
    %168 = vmatprep.subr.bf16.mxu0 0
    %169 = vmatpush1.bf16.msra.mxu0 0
    %170 = vmatprep.subr.bf16.mxu0 0
    %171 = vmatpush1.bf16.msra.mxu0 0
    %172 = vmatprep.subr.bf16.mxu0 0
    %173 = vmatpush1.bf16.msra.mxu0 0
    %174 = vmatprep.mubr.bf16.mxu0 0
    %175 = vmatmul.mubr.bf16.gmra.mrb[0].mxu0 %v95
    %v176 = vpop.f32.mrb[0].mxu0
    %v177 = vadd.f32 %v79, %v176
    %v178 = vpop.f32.mrb[0].mxu0
    %v179 = vpop.f32.mrb[0].mxu0
    %v180 = vadd.f32 %v79, %v179
    %v181 = vpop.f32.mrb[0].mxu0
    %182 = vmatprep.mubr.bf16.mxu0 0
    %183 = vmatmul.mubr.bf16.gmra.mrb[0].mxu0 %v98
    %v184 = vpop.f32.mrb[0].mxu0
    %v185 = vadd.f32 %v79, %v184
    %v186 = vpop.f32.mrb[0].mxu0
    %v187 = vpop.f32.mrb[0].mxu0
    %v188 = vadd.f32 %v79, %v187
    %v189 = vpop.f32.mrb[0].mxu0
    %190 = vmatprep.mubr.bf16.mxu0 0
    %191 = vmatmul.mubr.bf16.gmra.mrb[0].mxu0 %v101
    %v192 = vpop.f32.mrb[0].mxu0
    %v193 = vadd.f32 %v79, %v192
    %v194 = vpop.f32.mrb[0].mxu0
    %v195 = vpop.f32.mrb[0].mxu0
    %v196 = vadd.f32 %v79, %v195
    %v197 = vpop.f32.mrb[0].mxu0
    %198 = vmatprep.mubr.bf16.mxu0 0
    %199 = vmatmul.mubr.bf16.gmra.mrb[0].mxu0 %v104
    %v200 = vpop.f32.mrb[0].mxu0
    %v201 = vadd.f32 %v79, %v200
    %v202 = vpop.f32.mrb[0].mxu0
    %v203 = vpop.f32.mrb[0].mxu0
    %v204 = vadd.f32 %v79, %v203
    %v205 = vpop.f32.mrb[0].mxu0
    %206 = vmatprep.mubr.bf16.mxu0 0
    %207 = vmatmul.mubr.bf16.gmra.mrb[0].mxu0 %v107
    %v208 = vpop.f32.mrb[0].mxu0
    %v209 = vadd.f32 %v79, %v208
    %v210 = vpop.f32.mrb[0].mxu0
    %v211 = vpop.f32.mrb[0].mxu0
    %v212 = vadd.f32 %v79, %v211
    %v213 = vpop.f32.mrb[0].mxu0
    %214 = vmatprep.mubr.bf16.mxu0 0
    %215 = vmatmul.mubr.bf16.gmra.mrb[0].mxu0 %v110
    %v216 = vpop.f32.mrb[0].mxu0
    %v217 = vadd.f32 %v79, %v216
    %v218 = vpop.f32.mrb[0].mxu0
    %v219 = vpop.f32.mrb[0].mxu0
    %v220 = vadd.f32 %v79, %v219
    %v221 = vpop.f32.mrb[0].mxu0
    %222 = vmatprep.mubr.bf16.mxu0 0
    %223 = vmatmul.mubr.bf16.gmra.mrb[0].mxu0 %v113
    %v224 = vpop.f32.mrb[0].mxu0
    %v225 = vadd.f32 %v79, %v224
    %v226 = vpop.f32.mrb[0].mxu0
    %v227 = vpop.f32.mrb[0].mxu0
    %v228 = vadd.f32 %v79, %v227
    %v229 = vpop.f32.mrb[0].mxu0
    %230 = vmatprep.mubr.bf16.mxu0 0
    %231 = vmatmul.mubr.bf16.gmra.mrb[0].mxu0 %v116
    %v232 = vpop.f32.mrb[0].mxu0
    %v233 = vadd.f32 %v79, %v232
    %v234 = vpop.f32.mrb[0].mxu0
    %v235 = vpop.f32.mrb[0].mxu0
    %v236 = vadd.f32 %v79, %v235
    %v237 = vpop.f32.mrb[0].mxu0
    %238 = vmatprep.mubr.bf16.mxu0 0
    %239 = vmatmul.mubr.bf16.gmra.mrb[0].mxu0 %v119
    %v240 = vpop.f32.mrb[0].mxu0
    %v241 = vadd.f32 %v79, %v240
    %v242 = vpop.f32.mrb[0].mxu0
    %v243 = vpop.f32.mrb[0].mxu0
    %v244 = vadd.f32 %v79, %v243
    %v245 = vpop.f32.mrb[0].mxu0
    %246 = vmatprep.mubr.bf16.mxu0 0
    %247 = vmatmul.mubr.bf16.gmra.mrb[0].mxu0 %v122
    %v248 = vpop.f32.mrb[0].mxu0
    %v249 = vadd.f32 %v79, %v248
    %v250 = vpop.f32.mrb[0].mxu0
    %v251 = vpop.f32.mrb[0].mxu0
    %v252 = vadd.f32 %v79, %v251
    %v253 = vpop.f32.mrb[0].mxu0
    %254 = vmatprep.mubr.bf16.mxu0 0
    %255 = vmatmul.mubr.bf16.gmra.mrb[0].mxu0 %v125
    %v256 = vpop.f32.mrb[0].mxu0
    %v257 = vadd.f32 %v79, %v256
    %v258 = vpop.f32.mrb[0].mxu0
    %v259 = vpop.f32.mrb[0].mxu0
    %v260 = vadd.f32 %v79, %v259
    %v261 = vpop.f32.mrb[0].mxu0
    %262 = vmatprep.mubr.bf16.mxu0 0
    %263 = vmatmul.mubr.bf16.gmra.mrb[0].mxu0 %v128
    %v264 = vpop.f32.mrb[0].mxu0
    %v265 = vadd.f32 %v79, %v264
    %v266 = vpop.f32.mrb[0].mxu0
    %v267 = vpop.f32.mrb[0].mxu0
    %v268 = vadd.f32 %v79, %v267
    %v269 = vpop.f32.mrb[0].mxu0
    %270 = vmatprep.mubr.bf16.mxu0 0
    %271 = vmatmul.mubr.bf16.gmra.mrb[0].mxu0 %v131
    %v272 = vpop.f32.mrb[0].mxu0
    %v273 = vadd.f32 %v79, %v272
    %v274 = vpop.f32.mrb[0].mxu0
    %v275 = vpop.f32.mrb[0].mxu0
    %v276 = vadd.f32 %v79, %v275
    %v277 = vpop.f32.mrb[0].mxu0
    %278 = vmatprep.mubr.bf16.mxu0 0
    %279 = vmatmul.mubr.bf16.gmra.mrb[0].mxu0 %v134
    %v280 = vpop.f32.mrb[0].mxu0
    %v281 = vadd.f32 %v79, %v280
    %v282 = vpop.f32.mrb[0].mxu0
    %v283 = vpop.f32.mrb[0].mxu0
    %v284 = vadd.f32 %v79, %v283
    %v285 = vpop.f32.mrb[0].mxu0
    %286 = vmatprep.mubr.bf16.mxu0 0
    %287 = vmatmul.mubr.bf16.gmra.mrb[0].mxu0 %v137
    %v288 = vpop.f32.mrb[0].mxu0
    %v289 = vadd.f32 %v79, %v288
    %v290 = vpop.f32.mrb[0].mxu0
    %v291 = vpop.f32.mrb[0].mxu0
    %v292 = vadd.f32 %v79, %v291
    %v293 = vpop.f32.mrb[0].mxu0
    %294 = vmatprep.mubr.bf16.mxu0 0
    %295 = vmatmul.mubr.bf16.gmra.mrb[0].mxu0 %v140
    %v296 = vpop.f32.mrb[0].mxu0
    %v297 = vadd.f32 %v79, %v296
    %v298 = vpop.f32.mrb[0].mxu0
    %v299 = vpop.f32.mrb[0].mxu0
    %v300 = vadd.f32 %v79, %v299
    %v301 = vpop.f32.mrb[0].mxu0
    %302 = vdwg.mxu0
    %v303 = vmax.f32 %v177, 0.0
    %v304 = vmax.f32 %v180, 0.0
    %v305 = vmax.f32 %v185, 0.0
    %v306 = vmax.f32 %v188, 0.0
    %v307 = vmax.f32 %v193, 0.0
    %v308 = vmax.f32 %v196, 0.0
    %v309 = vmax.f32 %v201, 0.0
    %v310 = vmax.f32 %v204, 0.0
    %v311 = vmax.f32 %v209, 0.0
    %v312 = vmax.f32 %v212, 0.0
    %v313 = vmax.f32 %v217, 0.0
    %v314 = vmax.f32 %v220, 0.0
    %v315 = vmax.f32 %v225, 0.0
    %v316 = vmax.f32 %v228, 0.0
    %v317 = vmax.f32 %v233, 0.0
    %v318 = vmax.f32 %v236, 0.0
    %v319 = vmax.f32 %v241, 0.0
    %v320 = vmax.f32 %v244, 0.0
    %v321 = vmax.f32 %v249, 0.0
    %v322 = vmax.f32 %v252, 0.0
    %v323 = vmax.f32 %v257, 0.0
    %v324 = vmax.f32 %v260, 0.0
    %v325 = vmax.f32 %v265, 0.0
    %v326 = vmax.f32 %v268, 0.0
    %v327 = vmax.f32 %v273, 0.0
    %v328 = vmax.f32 %v276, 0.0
    %v329 = vmax.f32 %v281, 0.0
    %v330 = vmax.f32 %v284, 0.0
    %v331 = vmax.f32 %v289, 0.0
    %v332 = vmax.f32 %v292, 0.0
    %v333 = vmax.f32 %v297, 0.0
    %v334 = vmax.f32 %v300, 0.0
    %v335 = vpack.c.bf16 %v304, %v303
    %v336 = vpack.c.bf16 %v306, %v305
    %v337 = vpack.c.bf16 %v308, %v307
    %v338 = vpack.c.bf16 %v310, %v309
    %v339 = vpack.c.bf16 %v312, %v311
    %v340 = vpack.c.bf16 %v314, %v313
    %v341 = vpack.c.bf16 %v316, %v315
    %v342 = vpack.c.bf16 %v318, %v317
    %v343 = vpack.c.bf16 %v320, %v319
    %v344 = vpack.c.bf16 %v322, %v321
    %v345 = vpack.c.bf16 %v324, %v323
    %v346 = vpack.c.bf16 %v326, %v325
    %v347 = vpack.c.bf16 %v328, %v327
    %v348 = vpack.c.bf16 %v330, %v329
    %v349 = vpack.c.bf16 %v332, %v331
    %v350 = vpack.c.bf16 %v334, %v333
    %v351 = vld [vmem:[%s3] sm:$0xff]
    %v352 = vld [vmem:[%s3 + $0x8] sm:$0xff]
    %v353 = vld [vmem:[%s3 + $0x10] sm:$0xff]
    %v354 = vld [vmem:[%s3 + $0x18] sm:$0xff]
    %v355 = vld [vmem:[%s3 + $0x20] sm:$0xff]
    %v356 = vld [vmem:[%s3 + $0x28] sm:$0xff]
    %v357 = vld [vmem:[%s3 + $0x30] sm:$0xff]
    %v358 = vld [vmem:[%s3 + $0x38] sm:$0xff]
    %v359 = vld [vmem:[%s3 + $0x40] sm:$0xff]
    %v360 = vld [vmem:[%s3 + $0x48] sm:$0xff]
    %v361 = vld [vmem:[%s3 + $0x50] sm:$0xff]
    %v362 = vld [vmem:[%s3 + $0x58] sm:$0xff]
    %v363 = vld [vmem:[%s3 + $0x60] sm:$0xff]
    %v364 = vld [vmem:[%s3 + $0x68] sm:$0xff]
    %v365 = vld [vmem:[%s3 + $0x70] sm:$0xff]
    %v366 = vld [vmem:[%s3 + $0x78] sm:$0xff]
    %v367 = vld [vmem:[%s4] sm:$0x3]
    %v369 = vlaneseq
    %v370 = vshrl.u32 %v369, 7
    %v371 = vsub.s32 0, %v370
    %v372 = vrot.slane %v367, %v371
    %v373 = vlaneseq
    %v374 = vshrl.u32 %v373, 7
    %v375 = vsub.s32 1, %v374
    %v376 = vrot.slane %v367, %v375
    %v395 = vunpack.c.l.b16 %v351
    %v396 = vunpack.c.h.b16 %v351
    %v397 = vunpack.c.l.b16 %v352
    %v398 = vunpack.c.h.b16 %v352
    %v399 = vunpack.c.l.b16 %v353
    %v400 = vunpack.c.h.b16 %v353
    %v401 = vunpack.c.l.b16 %v354
    %v402 = vunpack.c.h.b16 %v354
    %v403 = vunpack.c.l.b16 %v355
    %v404 = vunpack.c.h.b16 %v355
    %v405 = vunpack.c.l.b16 %v356
    %v406 = vunpack.c.h.b16 %v356
    %v407 = vunpack.c.l.b16 %v357
    %v408 = vunpack.c.h.b16 %v357
    %v409 = vunpack.c.l.b16 %v358
    %v410 = vunpack.c.h.b16 %v358
    %v411 = vunpack.c.l.b16 %v359
    %v412 = vunpack.c.h.b16 %v359
    %v413 = vunpack.c.l.b16 %v360
    %v414 = vunpack.c.h.b16 %v360
    %v415 = vunpack.c.l.b16 %v361
    %v416 = vunpack.c.h.b16 %v361
    %v417 = vunpack.c.l.b16 %v362
    %v418 = vunpack.c.h.b16 %v362
    %v419 = vunpack.c.l.b16 %v363
    %v420 = vunpack.c.h.b16 %v363
    %v421 = vunpack.c.l.b16 %v364
    %v422 = vunpack.c.h.b16 %v364
    %v423 = vunpack.c.l.b16 %v365
    %v424 = vunpack.c.h.b16 %v365
    %v425 = vunpack.c.l.b16 %v366
    %v426 = vunpack.c.h.b16 %v366
    %v427 = vpack.c.b16 %v397, %v395
    %v428 = vpack.c.b16 %v398, %v396
    %v429 = vpack.c.b16 %v401, %v399
    %v430 = vpack.c.b16 %v402, %v400
    %v431 = vpack.c.b16 %v405, %v403
    %v432 = vpack.c.b16 %v406, %v404
    %v433 = vpack.c.b16 %v409, %v407
    %v434 = vpack.c.b16 %v410, %v408
    %v435 = vpack.c.b16 %v413, %v411
    %v436 = vpack.c.b16 %v414, %v412
    %v437 = vpack.c.b16 %v417, %v415
    %v438 = vpack.c.b16 %v418, %v416
    %v439 = vpack.c.b16 %v421, %v419
    %v440 = vpack.c.b16 %v422, %v420
    %v441 = vpack.c.b16 %v425, %v423
    %v442 = vpack.c.b16 %v426, %v424
    %459 = vmatprep.subr.bf16.mxu0 %v428
    %460 = vmatpush1.bf16.msra.mxu0 %v427
    %461 = vmatprep.subr.bf16.mxu0 %v430
    %462 = vmatpush1.bf16.msra.mxu0 %v429
    %463 = vmatprep.subr.bf16.mxu0 %v432
    %464 = vmatpush1.bf16.msra.mxu0 %v431
    %465 = vmatprep.subr.bf16.mxu0 %v434
    %466 = vmatpush1.bf16.msra.mxu0 %v433
    %467 = vmatprep.subr.bf16.mxu0 %v436
    %468 = vmatpush1.bf16.msra.mxu0 %v435
    %469 = vmatprep.subr.bf16.mxu0 %v438
    %470 = vmatpush1.bf16.msra.mxu0 %v437
    %471 = vmatprep.subr.bf16.mxu0 %v440
    %472 = vmatpush1.bf16.msra.mxu0 %v439
    %473 = vmatprep.subr.bf16.mxu0 %v442
    %474 = vmatpush1.bf16.msra.mxu0 %v441
    %475 = vmatprep.subr.bf16.mxu0 0
    %476 = vmatpush1.bf16.msra.mxu0 0
    %477 = vmatprep.subr.bf16.mxu0 0
    %478 = vmatpush1.bf16.msra.mxu0 0
    %479 = vmatprep.subr.bf16.mxu0 0
    %480 = vmatpush1.bf16.msra.mxu0 0
    %481 = vmatprep.subr.bf16.mxu0 0
    %482 = vmatpush1.bf16.msra.mxu0 0
    %483 = vmatprep.subr.bf16.mxu0 0
    %484 = vmatpush1.bf16.msra.mxu0 0
    %485 = vmatprep.subr.bf16.mxu0 0
    %486 = vmatpush1.bf16.msra.mxu0 0
    %487 = vmatprep.subr.bf16.mxu0 0
    %488 = vmatpush1.bf16.msra.mxu0 0
    %489 = vmatprep.subr.bf16.mxu0 0
    %490 = vmatpush1.bf16.msra.mxu0 0
    %491 = vmatprep.mubr.bf16.mxu0 0
    %492 = vmatmul.mubr.bf16.gmra.mrb[0].mxu0 %v335
    %v493 = vpop.f32.mrb[0].mxu0
    %v494 = vadd.f32 %v372, %v493
    %v495 = vpop.f32.mrb[0].mxu0
    %v496 = vadd.f32 %v376, %v495
    %v497 = vpop.f32.mrb[0].mxu0
    %v498 = vadd.f32 %v372, %v497
    %v499 = vpop.f32.mrb[0].mxu0
    %v500 = vadd.f32 %v376, %v499
    %501 = vmatprep.mubr.bf16.mxu0 0
    %502 = vmatmul.mubr.bf16.gmra.mrb[0].mxu0 %v336
    %v503 = vpop.f32.mrb[0].mxu0
    %v504 = vadd.f32 %v372, %v503
    %v505 = vpop.f32.mrb[0].mxu0
    %v506 = vadd.f32 %v376, %v505
    %v507 = vpop.f32.mrb[0].mxu0
    %v508 = vadd.f32 %v372, %v507
    %v509 = vpop.f32.mrb[0].mxu0
    %v510 = vadd.f32 %v376, %v509
    %511 = vmatprep.mubr.bf16.mxu0 0
    %512 = vmatmul.mubr.bf16.gmra.mrb[0].mxu0 %v337
    %v513 = vpop.f32.mrb[0].mxu0
    %v514 = vadd.f32 %v372, %v513
    %v515 = vpop.f32.mrb[0].mxu0
    %v516 = vadd.f32 %v376, %v515
    %v517 = vpop.f32.mrb[0].mxu0
    %v518 = vadd.f32 %v372, %v517
    %v519 = vpop.f32.mrb[0].mxu0
    %v520 = vadd.f32 %v376, %v519
    %521 = vmatprep.mubr.bf16.mxu0 0
    %522 = vmatmul.mubr.bf16.gmra.mrb[0].mxu0 %v338
    %v523 = vpop.f32.mrb[0].mxu0
    %v524 = vadd.f32 %v372, %v523
    %v525 = vpop.f32.mrb[0].mxu0
    %v526 = vadd.f32 %v376, %v525
    %v527 = vpop.f32.mrb[0].mxu0
    %v528 = vadd.f32 %v372, %v527
    %v529 = vpop.f32.mrb[0].mxu0
    %v530 = vadd.f32 %v376, %v529
    %531 = vmatprep.mubr.bf16.mxu0 0
    %532 = vmatmul.mubr.bf16.gmra.mrb[0].mxu0 %v339
    %v533 = vpop.f32.mrb[0].mxu0
    %v534 = vadd.f32 %v372, %v533
    %v535 = vpop.f32.mrb[0].mxu0
    %v536 = vadd.f32 %v376, %v535
    %v537 = vpop.f32.mrb[0].mxu0
    %v538 = vadd.f32 %v372, %v537
    %v539 = vpop.f32.mrb[0].mxu0
    %v540 = vadd.f32 %v376, %v539
    %541 = vmatprep.mubr.bf16.mxu0 0
    %542 = vmatmul.mubr.bf16.gmra.mrb[0].mxu0 %v340
    %v543 = vpop.f32.mrb[0].mxu0
    %v544 = vadd.f32 %v372, %v543
    %v545 = vpop.f32.mrb[0].mxu0
    %v546 = vadd.f32 %v376, %v545
    %v547 = vpop.f32.mrb[0].mxu0
    %v548 = vadd.f32 %v372, %v547
    %v549 = vpop.f32.mrb[0].mxu0
    %v550 = vadd.f32 %v376, %v549
    %551 = vmatprep.mubr.bf16.mxu0 0
    %552 = vmatmul.mubr.bf16.gmra.mrb[0].mxu0 %v341
    %v553 = vpop.f32.mrb[0].mxu0
    %v554 = vadd.f32 %v372, %v553
    %v555 = vpop.f32.mrb[0].mxu0
    %v556 = vadd.f32 %v376, %v555
    %v557 = vpop.f32.mrb[0].mxu0
    %v558 = vadd.f32 %v372, %v557
    %v559 = vpop.f32.mrb[0].mxu0
    %v560 = vadd.f32 %v376, %v559
    %561 = vmatprep.mubr.bf16.mxu0 0
    %562 = vmatmul.mubr.bf16.gmra.mrb[0].mxu0 %v342
    %v563 = vpop.f32.mrb[0].mxu0
    %v564 = vadd.f32 %v372, %v563
    %v565 = vpop.f32.mrb[0].mxu0
    %v566 = vadd.f32 %v376, %v565
    %v567 = vpop.f32.mrb[0].mxu0
    %v568 = vadd.f32 %v372, %v567
    %v569 = vpop.f32.mrb[0].mxu0
    %v570 = vadd.f32 %v376, %v569
    %571 = vmatprep.mubr.bf16.mxu0 0
    %572 = vmatmul.mubr.bf16.gmra.mrb[0].mxu0 %v343
    %v573 = vpop.f32.mrb[0].mxu0
    %v574 = vadd.f32 %v372, %v573
    %v575 = vpop.f32.mrb[0].mxu0
    %v576 = vadd.f32 %v376, %v575
    %v577 = vpop.f32.mrb[0].mxu0
    %v578 = vadd.f32 %v372, %v577
    %v579 = vpop.f32.mrb[0].mxu0
    %v580 = vadd.f32 %v376, %v579
    %581 = vmatprep.mubr.bf16.mxu0 0
    %582 = vmatmul.mubr.bf16.gmra.mrb[0].mxu0 %v344
    %v583 = vpop.f32.mrb[0].mxu0
    %v584 = vadd.f32 %v372, %v583
    %v585 = vpop.f32.mrb[0].mxu0
    %v586 = vadd.f32 %v376, %v585
    %v587 = vpop.f32.mrb[0].mxu0
    %v588 = vadd.f32 %v372, %v587
    %v589 = vpop.f32.mrb[0].mxu0
    %v590 = vadd.f32 %v376, %v589
    %591 = vmatprep.mubr.bf16.mxu0 0
    %592 = vmatmul.mubr.bf16.gmra.mrb[0].mxu0 %v345
    %v593 = vpop.f32.mrb[0].mxu0
    %v594 = vadd.f32 %v372, %v593
    %v595 = vpop.f32.mrb[0].mxu0
    %v596 = vadd.f32 %v376, %v595
    %v597 = vpop.f32.mrb[0].mxu0
    %v598 = vadd.f32 %v372, %v597
    %v599 = vpop.f32.mrb[0].mxu0
    %v600 = vadd.f32 %v376, %v599
    %601 = vmatprep.mubr.bf16.mxu0 0
    %602 = vmatmul.mubr.bf16.gmra.mrb[0].mxu0 %v346
    %v603 = vpop.f32.mrb[0].mxu0
    %v604 = vadd.f32 %v372, %v603
    %v605 = vpop.f32.mrb[0].mxu0
    %v606 = vadd.f32 %v376, %v605
    %v607 = vpop.f32.mrb[0].mxu0
    %v608 = vadd.f32 %v372, %v607
    %v609 = vpop.f32.mrb[0].mxu0
    %v610 = vadd.f32 %v376, %v609
    %611 = vmatprep.mubr.bf16.mxu0 0
    %612 = vmatmul.mubr.bf16.gmra.mrb[0].mxu0 %v347
    %v613 = vpop.f32.mrb[0].mxu0
    %v614 = vadd.f32 %v372, %v613
    %v615 = vpop.f32.mrb[0].mxu0
    %v616 = vadd.f32 %v376, %v615
    %v617 = vpop.f32.mrb[0].mxu0
    %v618 = vadd.f32 %v372, %v617
    %v619 = vpop.f32.mrb[0].mxu0
    %v620 = vadd.f32 %v376, %v619
    %621 = vmatprep.mubr.bf16.mxu0 0
    %622 = vmatmul.mubr.bf16.gmra.mrb[0].mxu0 %v348
    %v623 = vpop.f32.mrb[0].mxu0
    %v624 = vadd.f32 %v372, %v623
    %v625 = vpop.f32.mrb[0].mxu0
    %v626 = vadd.f32 %v376, %v625
    %v627 = vpop.f32.mrb[0].mxu0
    %v628 = vadd.f32 %v372, %v627
    %v629 = vpop.f32.mrb[0].mxu0
    %v630 = vadd.f32 %v376, %v629
    %631 = vmatprep.mubr.bf16.mxu0 0
    %632 = vmatmul.mubr.bf16.gmra.mrb[0].mxu0 %v349
    %v633 = vpop.f32.mrb[0].mxu0
    %v634 = vadd.f32 %v372, %v633
    %v635 = vpop.f32.mrb[0].mxu0
    %v636 = vadd.f32 %v376, %v635
    %v637 = vpop.f32.mrb[0].mxu0
    %v638 = vadd.f32 %v372, %v637
    %v639 = vpop.f32.mrb[0].mxu0
    %v640 = vadd.f32 %v376, %v639
    %641 = vmatprep.mubr.bf16.mxu0 0
    %642 = vmatmul.mubr.bf16.gmra.mrb[0].mxu0 %v350
    %v643 = vpop.f32.mrb[0].mxu0
    %v644 = vadd.f32 %v372, %v643
    %v645 = vpop.f32.mrb[0].mxu0
    %v646 = vadd.f32 %v376, %v645
    %v647 = vpop.f32.mrb[0].mxu0
    %v648 = vadd.f32 %v372, %v647
    %v649 = vpop.f32.mrb[0].mxu0
    %v650 = vadd.f32 %v376, %v649
    %651 = vdwg.mxu0
    %v652 = vtanh.pop %v494
    %v653 = vtanh.pop %v496
    %v654 = vtanh.pop %v498
    %v655 = vtanh.pop %v500
    %v656 = vtanh.pop %v504
    %v657 = vtanh.pop %v506
    %v658 = vtanh.pop %v508
    %v659 = vtanh.pop %v510
    %v660 = vtanh.pop %v514
    %v661 = vtanh.pop %v516
    %v662 = vtanh.pop %v518
    %v663 = vtanh.pop %v520
    %v664 = vtanh.pop %v524
    %v665 = vtanh.pop %v526
    %v666 = vtanh.pop %v528
    %v667 = vtanh.pop %v530
    %v668 = vtanh.pop %v534
    %v669 = vtanh.pop %v536
    %v670 = vtanh.pop %v538
    %v671 = vtanh.pop %v540
    %v672 = vtanh.pop %v544
    %v673 = vtanh.pop %v546
    %v674 = vtanh.pop %v548
    %v675 = vtanh.pop %v550
    %v676 = vtanh.pop %v554
    %v677 = vtanh.pop %v556
    %v678 = vtanh.pop %v558
    %v679 = vtanh.pop %v560
    %v680 = vtanh.pop %v564
    %v681 = vtanh.pop %v566
    %v682 = vtanh.pop %v568
    %v683 = vtanh.pop %v570
    %v684 = vtanh.pop %v574
    %v685 = vtanh.pop %v576
    %v686 = vtanh.pop %v578
    %v687 = vtanh.pop %v580
    %v688 = vtanh.pop %v584
    %v689 = vtanh.pop %v586
    %v690 = vtanh.pop %v588
    %v691 = vtanh.pop %v590
    %v692 = vtanh.pop %v594
    %v693 = vtanh.pop %v596
    %v694 = vtanh.pop %v598
    %v695 = vtanh.pop %v600
    %v696 = vtanh.pop %v604
    %v697 = vtanh.pop %v606
    %v698 = vtanh.pop %v608
    %v699 = vtanh.pop %v610
    %v700 = vtanh.pop %v614
    %v701 = vtanh.pop %v616
    %v702 = vtanh.pop %v618
    %v703 = vtanh.pop %v620
    %v704 = vtanh.pop %v624
    %v705 = vtanh.pop %v626
    %v706 = vtanh.pop %v628
    %v707 = vtanh.pop %v630
    %v708 = vtanh.pop %v634
    %v709 = vtanh.pop %v636
    %v710 = vtanh.pop %v638
    %v711 = vtanh.pop %v640
    %v712 = vtanh.pop %v644
    %v713 = vtanh.pop %v646
    %v714 = vtanh.pop %v648
    %v715 = vtanh.pop %v650
    %716 = vst [vmem:[#allocation2] sm:$0xff] %v652
    %717 = vst [vmem:[#allocation2 + $0x8] sm:$0xff] %v653
    %718 = vst [vmem:[#allocation2 + $0x10] sm:$0xff] %v654
    %719 = vst [vmem:[#allocation2 + $0x18] sm:$0xff] %v655
    %720 = vst [vmem:[#allocation2 + $0x20] sm:$0xff] %v656
    %721 = vst [vmem:[#allocation2 + $0x28] sm:$0xff] %v657
    %722 = vst [vmem:[#allocation2 + $0x30] sm:$0xff] %v658
    %723 = vst [vmem:[#allocation2 + $0x38] sm:$0xff] %v659
    %724 = vst [vmem:[#allocation2 + $0x40] sm:$0xff] %v660
    %725 = vst [vmem:[#allocation2 + $0x48] sm:$0xff] %v661
    %726 = vst [vmem:[#allocation2 + $0x50] sm:$0xff] %v662
    %727 = vst [vmem:[#allocation2 + $0x58] sm:$0xff] %v663
    %728 = vst [vmem:[#allocation2 + $0x60] sm:$0xff] %v664
    %729 = vst [vmem:[#allocation2 + $0x68] sm:$0xff] %v665
    %730 = vst [vmem:[#allocation2 + $0x70] sm:$0xff] %v666
    %731 = vst [vmem:[#allocation2 + $0x78] sm:$0xff] %v667
    %732 = vst [vmem:[#allocation2 + $0x80] sm:$0xff] %v668
    %733 = vst [vmem:[#allocation2 + $0x88] sm:$0xff] %v669
    %734 = vst [vmem:[#allocation2 + $0x90] sm:$0xff] %v670
    %735 = vst [vmem:[#allocation2 + $0x98] sm:$0xff] %v671
    %736 = vst [vmem:[#allocation2 + $0xa0] sm:$0xff] %v672
    %737 = vst [vmem:[#allocation2 + $0xa8] sm:$0xff] %v673
    %738 = vst [vmem:[#allocation2 + $0xb0] sm:$0xff] %v674
    %739 = vst [vmem:[#allocation2 + $0xb8] sm:$0xff] %v675
    %740 = vst [vmem:[#allocation2 + $0xc0] sm:$0xff] %v676
    %741 = vst [vmem:[#allocation2 + $0xc8] sm:$0xff] %v677
    %742 = vst [vmem:[#allocation2 + $0xd0] sm:$0xff] %v678
    %743 = vst [vmem:[#allocation2 + $0xd8] sm:$0xff] %v679
    %744 = vst [vmem:[#allocation2 + $0xe0] sm:$0xff] %v680
    %745 = vst [vmem:[#allocation2 + $0xe8] sm:$0xff] %v681
    %746 = vst [vmem:[#allocation2 + $0xf0] sm:$0xff] %v682
    %747 = vst [vmem:[#allocation2 + $0xf8] sm:$0xff] %v683
    %748 = vst [vmem:[#allocation2 + $0x100] sm:$0xff] %v684
    %749 = vst [vmem:[#allocation2 + $0x108] sm:$0xff] %v685
    %750 = vst [vmem:[#allocation2 + $0x110] sm:$0xff] %v686
    %751 = vst [vmem:[#allocation2 + $0x118] sm:$0xff] %v687
    %752 = vst [vmem:[#allocation2 + $0x120] sm:$0xff] %v688
    %753 = vst [vmem:[#allocation2 + $0x128] sm:$0xff] %v689
    %754 = vst [vmem:[#allocation2 + $0x130] sm:$0xff] %v690
    %755 = vst [vmem:[#allocation2 + $0x138] sm:$0xff] %v691
    %756 = vst [vmem:[#allocation2 + $0x140] sm:$0xff] %v692
    %757 = vst [vmem:[#allocation2 + $0x148] sm:$0xff] %v693
    %758 = vst [vmem:[#allocation2 + $0x150] sm:$0xff] %v694
    %759 = vst [vmem:[#allocation2 + $0x158] sm:$0xff] %v695
    %760 = vst [vmem:[#allocation2 + $0x160] sm:$0xff] %v696
    %761 = vst [vmem:[#allocation2 + $0x168] sm:$0xff] %v697
    %762 = vst [vmem:[#allocation2 + $0x170] sm:$0xff] %v698
    %763 = vst [vmem:[#allocation2 + $0x178] sm:$0xff] %v699
    %764 = vst [vmem:[#allocation2 + $0x180] sm:$0xff] %v700
    %765 = vst [vmem:[#allocation2 + $0x188] sm:$0xff] %v701
    %766 = vst [vmem:[#allocation2 + $0x190] sm:$0xff] %v702
    %767 = vst [vmem:[#allocation2 + $0x198] sm:$0xff] %v703
    %768 = vst [vmem:[#allocation2 + $0x1a0] sm:$0xff] %v704
    %769 = vst [vmem:[#allocation2 + $0x1a8] sm:$0xff] %v705
    %770 = vst [vmem:[#allocation2 + $0x1b0] sm:$0xff] %v706
    %771 = vst [vmem:[#allocation2 + $0x1b8] sm:$0xff] %v707
    %772 = vst [vmem:[#allocation2 + $0x1c0] sm:$0xff] %v708
    %773 = vst [vmem:[#allocation2 + $0x1c8] sm:$0xff] %v709
    %774 = vst [vmem:[#allocation2 + $0x1d0] sm:$0xff] %v710
    %775 = vst [vmem:[#allocation2 + $0x1d8] sm:$0xff] %v711
    %776 = vst [vmem:[#allocation2 + $0x1e0] sm:$0xff] %v712
    %777 = vst [vmem:[#allocation2 + $0x1e8] sm:$0xff] %v713
    %778 = vst [vmem:[#allocation2 + $0x1f0] sm:$0xff] %v714
    %779 = vst [vmem:[#allocation2 + $0x1f8] sm:$0xff] %v715
    // Predicated region
    $region22: #{tpu_custom_call.1} parent=1 // pred_check
      _
    $region23: #{tpu_custom_call.1} parent=1 // pred_check_branch
      %781 = sbr.rel (0) target = $region25
    $region24: #{tpu_custom_call.1} parent=1 // pred_region
      %s783 = ssub.s32 8192, 8192
      %784 = vsyncadd [#allocation3], %s783
      %s785 = sshll.u32 [#allocation2], 4
      %s786 = int_to_ptr.vmem [resolvable:$true] %s785
      %791 = dma.vmem_to_hbm [thread:$0]  %s786, 8192, %s5, [#allocation3], 256, 256, 16
    $region25: #{tpu_custom_call.1} parent=1 // pred_fallthru
      _
    // Predicated region
    $region26: #{tpu_custom_call.1} parent=1 // pred_check
      _
    $region27: #{tpu_custom_call.1} parent=1 // pred_check_branch
      %793 = sbr.rel (0) target = $region29
    $region28: #{tpu_custom_call.1} parent=1 // pred_region
      %794 = dma.done [#allocation3], 8192
    $region29: #{tpu_custom_call.1} parent=1 // pred_fallthru
      _
    %795 = vsyncpa [#allocation3], 1

</llo_original>
